<compile_context>
chip_gen: v7x
topology: tpu7x:2x2x1
jax: 0.10.0
libtpu: 0.0.40
codegen_flags: <defaults>
</compile_context>

<pallas_src>
import jax
import jax.numpy as jnp
from jax.experimental import pallas as pl
from jax.experimental.pallas import tpu as pltpu


def dense_relu_kernel(x_ref, w_ref, b_ref, o_ref):
    # x_ref: [tm, tk] (bf16 activations)
    # w_ref: [tk, tn] (bf16 weight tile, already [IN, OUT] layout)
    # b_ref: [1, tn]  (f32 bias slice for this N tile)
    # o_ref: [tm, tn] (f32 output tile; doubles as the K accumulator)
    k = pl.program_id(2)

    @pl.when(k == 0)
    def _():
        o_ref[...] = jnp.zeros_like(o_ref)

    # Canonical [tm,tk] x [tk,tn] MXU contraction, f32 accumulate.
    o_ref[...] += jnp.dot(x_ref[...], w_ref[...],
                          preferred_element_type=jnp.float32)

    @pl.when(k == pl.num_programs(2) - 1)
    def _():
        # bias broadcast + ReLU epilogue in f32; Dropout == identity (eval).
        o_ref[...] = jnp.maximum(o_ref[...] + b_ref[...], 0.0)


def _round_up(x, m):
    return ((x + m - 1) // m) * m


def prepare_dense_relu_params(weight, bias, *, tn_max=1024, tk_max=1024,
                              compute_dtype=jnp.bfloat16):
    """One-time (layer-init) prep of nn.Linear params for the Pallas kernel.

    weight: [OUT, IN] f32 (PyTorch layout), bias: [OUT] f32.
    Returns (w_t, b_row, tn, tk, out_features) with the weight transposed to
    [IN, OUT], zero-padded to tile-legal sizes and cast to the MXU dtype, so
    nothing is padded/transposed in HBM per call.
    """
    OUT, IN = weight.shape

    # N tile: lane dim, multiple of 128 for unmasked (lane-dense) stores.
    tn = min(tn_max, _round_up(OUT, 128))
    OUTp = _round_up(OUT, tn)
    # If a single N block covers everything but splits evenly into two
    # 128-multiples, use two blocks so both v7x TensorCores get work (free:
    # no extra padding, same OUTp).
    if OUTp == tn and tn >= 256 and (tn // 2) % 128 == 0:
        tn //= 2

    # K tile: take the whole reduction in one block when it fits (then x needs
    # no per-call K padding); otherwise a 128-multiple tile, W padded once here.
    if IN <= tk_max:
        tk, INp = IN, IN
    else:
        tk = tk_max
        INp = _round_up(IN, tk)

    w_t = jnp.asarray(weight, jnp.float32).T                  # [IN, OUT], once
    if INp != IN or OUTp != OUT:
        w_t = jnp.pad(w_t, ((0, INp - IN), (0, OUTp - OUT)))  # exact (zeros)
    w_t = w_t.astype(compute_dtype)

    b_row = jnp.asarray(bias, jnp.float32)
    if OUTp != OUT:
        b_row = jnp.pad(b_row, (0, OUTp - OUT))
    b_row = b_row.reshape(1, OUTp)

    return w_t, b_row, tn, tk, OUT


def dense_relu(x, params, *, tm_max=512):
    """x: [B, IN] f32; params: output of prepare_dense_relu_params."""
    w_t, b_row, tn, tk, out_features = params
    B, IN = x.shape
    INp, OUTp = w_t.shape
    compute_dtype = w_t.dtype
    assert INp >= IN, "prepared weight K dim smaller than input feature dim"

    # M tile: multiple of 16 for bf16 sublane packing (8 for f32).
    m_unit = 16 if compute_dtype == jnp.bfloat16 else 8
    tm = min(tm_max, _round_up(B, m_unit))
    Bp = _round_up(B, tm)

    xp = x
    if Bp != B or INp != IN:
        # Zero-pad rows / K tail: K zeros are exact for the accumulation,
        # padded output rows are sliced off below.
        xp = jnp.pad(x, ((0, Bp - B), (0, INp - IN)))
    xp = xp.astype(compute_dtype)

    grid = (Bp // tm, OUTp // tn, INp // tk)   # reduction axis (K) last

    in_bytes = jnp.dtype(compute_dtype).itemsize
    cost = pl.CostEstimate(
        flops=2 * Bp * INp * OUTp,
        transcendentals=0,
        bytes_accessed=(in_bytes * Bp * INp * grid[1]        # x re-read per N block
                        + in_bytes * INp * OUTp * grid[0]    # W re-read per M block
                        + 4 * Bp * OUTp                      # output write
                        + 4 * OUTp * grid[0]),               # bias re-read
    )

    out_padded = pl.pallas_call(
        dense_relu_kernel,
        out_shape=jax.ShapeDtypeStruct((Bp, OUTp), jnp.float32),
        grid_spec=pltpu.PrefetchScalarGridSpec(
            num_scalar_prefetch=0,
            grid=grid,
            in_specs=[
                pl.BlockSpec((tm, tk), lambda i, j, k: (i, k)),   # x tile
                pl.BlockSpec((tk, tn), lambda i, j, k: (k, j)),   # W tile [IN,OUT]
                pl.BlockSpec((1, tn), lambda i, j, k: (0, j)),    # bias slice
            ],
            out_specs=pl.BlockSpec((tm, tn), lambda i, j, k: (i, j)),
        ),
        compiler_params=pltpu.CompilerParams(
            dimension_semantics=("parallel", "parallel", "arbitrary"),
            vmem_limit_bytes=48 * 1024 * 1024,   # fits v7x 64 MiB physical VMEM
        ),
        cost_estimate=cost,
    )(xp, w_t, b_row)

    if Bp == B and OUTp == out_features:
        return out_padded
    return out_padded[:B, :out_features]


if __name__ == "__main__":
    key = jax.random.PRNGKey(0)
    k_x, k_w, k_b = jax.random.split(key, 3)

    batch = 16
    input_size = 64
    output_size = 48
    dropout_rate = 0.1  # identity at inference

    # Deterministic PyTorch-like init: uniform(-1/sqrt(in), 1/sqrt(in))
    bound = 1.0 / (input_size ** 0.5)
    weight = jax.random.uniform(k_w, (output_size, input_size),
                                minval=-bound, maxval=bound, dtype=jnp.float32)
    bias = jax.random.uniform(k_b, (output_size,),
                              minval=-bound, maxval=bound, dtype=jnp.float32)
    x = jax.random.normal(k_x, (batch, input_size), dtype=jnp.float32)

    # One-time layer-init prep (transpose + pad + bf16 cast of W, pad of b).
    params = prepare_dense_relu_params(weight, bias)

    out = dense_relu(x, params)
    out = jax.block_until_ready(out)
    assert out.shape == (batch, output_size)

    # Tight check vs a reference with the same bf16 operand rounding
    # (products exact in f32, f32 accumulation — matches the kernel's math).
    xb = x.astype(jnp.bfloat16).astype(jnp.float32)
    wb = weight.astype(jnp.bfloat16).astype(jnp.float32)
    ref_bf16 = jnp.maximum(xb @ wb.T + bias, 0.0)
    assert jnp.allclose(out, ref_bf16, atol=1e-3, rtol=1e-3), \
        "mismatch vs bf16-operand reference"

    # Loose check vs the full-f32 PyTorch-module forward (bf16 rounding only).
    ref_f32 = jnp.maximum(x @ weight.T + bias, 0.0)
    assert jnp.allclose(out, ref_f32, atol=5e-2, rtol=5e-2), \
        "mismatch vs f32 reference"

    print("KERNEL_OK")
</pallas_src>

<mosaic_0001>
module attributes {stable_mosaic.version = 11 : i64} {
  func.func @dense_relu_kernel(%arg0: i32, %arg1: i32, %arg2: i32, %arg3: memref<16x64xbf16, #tpu.memory_space<vmem>>, %arg4: memref<64x128xbf16, #tpu.memory_space<vmem>>, %arg5: memref<1x128xf32, #tpu.memory_space<vmem>>, %arg6: memref<16x128xf32, #tpu.memory_space<vmem>>) attributes {dimension_semantics = [#tpu.dimension_semantics<parallel>, #tpu.dimension_semantics<parallel>, #tpu.dimension_semantics<arbitrary>], iteration_bounds = array<i64: 1, 1, 1>, scalar_prefetch = 0 : i64, scratch_operands = 0 : i64, tpu.core_type = #tpu.core_type<tc>, window_params = [{transform_indices = @transform_0, window_bounds = array<i64: 16, 64>}, {transform_indices = @transform_1, window_bounds = array<i64: 64, 128>}, {transform_indices = @transform_2, window_bounds = array<i64: 1, 128>}, {transform_indices = @transform_3, window_bounds = array<i64: 16, 128>}]} {
    %c0_i32 = arith.constant 0 : i32
    %0 = arith.cmpi eq, %arg2, %c0_i32 : i32
    %1 = arith.extui %0 : i1 to i32
    %c0_i32_0 = arith.constant 0 : i32
    %2 = arith.cmpi ne, %1, %c0_i32_0 : i32
    scf.if %2 {
      %cst_10 = arith.constant 0.000000e+00 : f32
      %12 = vector.broadcast %cst_10 : f32 to vector<16x128xf32>
      %c0_11 = arith.constant 0 : index
      %c0_12 = arith.constant 0 : index
      %13 = vector.load %arg6[%c0_11, %c0_12] : memref<16x128xf32, #tpu.memory_space<vmem>>, vector<16x128xf32>
      tpu.vector_store %arg6[%c0_11, %c0_12], %12 {strides = array<i32>} : memref<16x128xf32, #tpu.memory_space<vmem>>, vector<16x128xf32>,
    } else {
    }
    %c0 = arith.constant 0 : index
    %c0_1 = arith.constant 0 : index
    %3 = vector.load %arg6[%c0, %c0_1] : memref<16x128xf32, #tpu.memory_space<vmem>>, vector<16x128xf32>
    %c0_2 = arith.constant 0 : index
    %c0_3 = arith.constant 0 : index
    %4 = vector.load %arg3[%c0_2, %c0_3] : memref<16x64xbf16, #tpu.memory_space<vmem>>, vector<16x64xbf16>
    %c0_4 = arith.constant 0 : index
    %c0_5 = arith.constant 0 : index
    %5 = vector.load %arg4[%c0_4, %c0_5] : memref<64x128xbf16, #tpu.memory_space<vmem>>, vector<64x128xbf16>
    %cst = arith.constant dense<0.000000e+00> : vector<16x128xf32>
    %6 = tpu.matmul %4, %5, %cst {dimension_numbers = #tpu.dot_dimension_numbers<[1], [0], [0], [1], [0, 0, 1, 1], [], []>} : vector<16x64xbf16>, vector<64x128xbf16>, vector<16x128xf32> -> vector<16x128xf32>
    %7 = arith.addf %3, %6 : vector<16x128xf32>
    %c0_6 = arith.constant 0 : index
    %c0_7 = arith.constant 0 : index
    %8 = vector.load %arg6[%c0_6, %c0_7] : memref<16x128xf32, #tpu.memory_space<vmem>>, vector<16x128xf32>
    tpu.vector_store %arg6[%c0_6, %c0_7], %7 {strides = array<i32>} : memref<16x128xf32, #tpu.memory_space<vmem>>, vector<16x128xf32>,
    %c0_i32_8 = arith.constant 0 : i32
    %9 = arith.cmpi eq, %arg2, %c0_i32_8 : i32
    %10 = arith.extui %9 : i1 to i32
    %c0_i32_9 = arith.constant 0 : i32
    %11 = arith.cmpi ne, %10, %c0_i32_9 : i32
    scf.if %11 {
      %c0_10 = arith.constant 0 : index
      %c0_11 = arith.constant 0 : index
      %12 = vector.load %arg6[%c0_10, %c0_11] : memref<16x128xf32, #tpu.memory_space<vmem>>, vector<16x128xf32>
      %c0_12 = arith.constant 0 : index
      %c0_13 = arith.constant 0 : index
      %13 = vector.load %arg5[%c0_12, %c0_13] : memref<1x128xf32, #tpu.memory_space<vmem>>, vector<1x128xf32>
      %14 = vector.broadcast %13 : vector<1x128xf32> to vector<16x128xf32>
      %15 = arith.addf %12, %14 : vector<16x128xf32>
      %cst_14 = arith.constant 0.000000e+00 : f32
      %16 = vector.broadcast %cst_14 : f32 to vector<16x128xf32>
      %17 = arith.maximumf %15, %16 : vector<16x128xf32>
      %c0_15 = arith.constant 0 : index
      %c0_16 = arith.constant 0 : index
      %18 = vector.load %arg6[%c0_15, %c0_16] : memref<16x128xf32, #tpu.memory_space<vmem>>, vector<16x128xf32>
      tpu.vector_store %arg6[%c0_15, %c0_16], %17 {strides = array<i32>} : memref<16x128xf32, #tpu.memory_space<vmem>>, vector<16x128xf32>,
    } else {
    }
    return
  }
  func.func @transform_0(%arg0: i32, %arg1: i32, %arg2: i32) -> (i32, i32) {
    %c0_i32 = arith.constant 0 : i32
    return %arg0, %arg2 : i32, i32
  }
  func.func @transform_1(%arg0: i32, %arg1: i32, %arg2: i32) -> (i32, i32) {
    %c0_i32 = arith.constant 0 : i32
    return %arg2, %arg1 : i32, i32
  }
  func.func @transform_2(%arg0: i32, %arg1: i32, %arg2: i32) -> (i32, i32) {
    %c0_i32 = arith.constant 0 : i32
    %c0_i32_0 = arith.constant 0 : i32
    return %c0_i32, %arg1 : i32, i32
  }
  func.func @transform_3(%arg0: i32, %arg1: i32, %arg2: i32) -> (i32, i32) {
    %c0_i32 = arith.constant 0 : i32
    return %arg0, %arg1 : i32, i32
  }
}

</mosaic_0001>

<llo_original>
// kernel: tpu_custom_call.1
$region0: #{tpu_custom_call.1}
  #allocation0 [shape = 'u32[]', space=smem, size = 0x4, offset = 0x4, fixed_abs, tag = 'smem constant byte address 0x4 - core index']
  #allocation1 [shape = 'u32[144,128]{1,0:T(1,128)}', space=vmem, size = 0x12000, scoped, tag = 'internal scratch']
  %s0 = inlined_call_operand.hbm [shape: bf16[16,64], index: 0, kind: input, shape index: {}]
  %s1 = inlined_call_operand.hbm [shape: bf16[64,128], index: 1, kind: input, shape index: {}]
  %s2 = inlined_call_operand.vmem [shape: f32[1,128], index: 2, kind: input, shape index: {}]
  %s3 = inlined_call_operand.hbm [shape: f32[16,128], index: 3, kind: output, shape index: {}]
  %s4 = sld [smem:[#allocation0]]
  $region38: #{tpu_custom_call.1} parent=0
    _
  %s6 = ssub.s32 1, %s4
  %s7 = scalar_select 0, %s6, %s4
  $region1: #{tpu_custom_call.1} parent=0
    #allocation2 [shape = 'u8[4096]{0}', space=vmem, size = 0x1000, scoped, tag = 'input window, operand 0, single buffered']
    #allocation3 [shape = 's32[1]{0}', space=sflag, size = 0x4, scoped, tag = 'scoped memory for tpu_custom_call.1']
    #allocation4 [shape = 's32[1]{0}', space=sflag, size = 0x4, scoped, tag = 'scoped memory for tpu_custom_call.1']
    #allocation5 [shape = 'u8[16384]{0}', space=vmem, size = 0x4000, scoped, tag = 'input window, operand 1, single buffered']
    #allocation6 [shape = 's32[1]{0}', space=sflag, size = 0x4, scoped, tag = 'scoped memory for tpu_custom_call.1']
    #allocation7 [shape = 'u8[8192]{0}', space=vmem, size = 0x2000, scoped, tag = 'output window, operand 0, single buffered']
    %8 = vsyncpa [#allocation3], 0
    %9 = vsyncpa [#allocation6], 0
    %10 = vsyncpa [#allocation4], 0
    // Predicated region
    $region2: #{tpu_custom_call.1} parent=1 // pred_check
      _
    $region3: #{tpu_custom_call.1} parent=1 // pred_check_branch
      %12 = sbr.rel (0) target = $region5
    $region4: #{tpu_custom_call.1} parent=1 // pred_region
      %s14 = ssub.s32 128, 128
      %15 = vsyncadd [#allocation3], %s14
      %s16 = sshll.u32 [#allocation2], 4
      %s17 = int_to_ptr.vmem [resolvable:$true] %s16
      %22 = dma.hbm_to_vmem [thread:$0]  %s0, 128, %s17, [#allocation3], 64, 64, 4
    $region5: #{tpu_custom_call.1} parent=1 // pred_fallthru
      _
    // Predicated region
    $region6: #{tpu_custom_call.1} parent=1 // pred_check
      _
    $region7: #{tpu_custom_call.1} parent=1 // pred_check_branch
      %24 = sbr.rel (0) target = $region9
    $region8: #{tpu_custom_call.1} parent=1 // pred_region
      %s26 = ssub.s32 512, 512
      %27 = vsyncadd [#allocation6], %s26
      %s28 = sshll.u32 [#allocation5], 4
      %s29 = int_to_ptr.vmem [resolvable:$true] %s28
      %34 = dma.hbm_to_vmem [thread:$0]  %s1, 512, %s29, [#allocation6], 64, 64, 4
    $region9: #{tpu_custom_call.1} parent=1 // pred_fallthru
      _
    // Predicated region
    $region10: #{tpu_custom_call.1} parent=1 // pred_check
      _
    $region11: #{tpu_custom_call.1} parent=1 // pred_check_branch
      %36 = sbr.rel (0) target = $region13
    $region12: #{tpu_custom_call.1} parent=1 // pred_region
      _
    $region13: #{tpu_custom_call.1} parent=1 // pred_fallthru
      _
    // Predicated region
    $region14: #{tpu_custom_call.1} parent=1 // pred_check
      _
    $region15: #{tpu_custom_call.1} parent=1 // pred_check_branch
      %38 = sbr.rel (0) target = $region17
    $region16: #{tpu_custom_call.1} parent=1 // pred_region
      %39 = dma.done [#allocation3], 128
    $region17: #{tpu_custom_call.1} parent=1 // pred_fallthru
      _
    // Predicated region
    $region18: #{tpu_custom_call.1} parent=1 // pred_check
      _
    $region19: #{tpu_custom_call.1} parent=1 // pred_check_branch
      %41 = sbr.rel (0) target = $region21
    $region20: #{tpu_custom_call.1} parent=1 // pred_region
      %42 = dma.done [#allocation6], 512
    $region21: #{tpu_custom_call.1} parent=1 // pred_fallthru
      _
    %p44 = scmp.eq.s32.totalorder 0, 0
    // Predicated region
    $region22: #{tpu_custom_call.1} parent=1 // pred_check
      %p45 = pneg %p44
    $region23: #{tpu_custom_call.1} parent=1 // pred_check_branch
      %47 = sbr.rel (%p45) target = $region25
    $region24: #{tpu_custom_call.1} parent=1 // pred_region
      %48 = vst [vmem:[#allocation7] sm:$0xff] 0.0
      %49 = vst [vmem:[#allocation7 + $0x8] sm:$0xff] 0.0
    $region25: #{tpu_custom_call.1} parent=1 // pred_fallthru
      _
    %v50 = vld [vmem:[#allocation7] sm:$0xff]
    %v51 = vld [vmem:[#allocation7 + $0x8] sm:$0xff]
    %v52 = vld [vmem:[#allocation2] sm:$0xf]
    %v53 = vld [vmem:[#allocation2 + $0x4] sm:$0xf]
    %v54 = vld [vmem:[#allocation5] sm:$0xf]
    %v55 = vld [vmem:[#allocation5 + $0x4] sm:$0xf]
    %v56 = vld [vmem:[#allocation5 + $0x8] sm:$0xf]
    %v57 = vld [vmem:[#allocation5 + $0xc] sm:$0xf]
    %v58 = vld [vmem:[#allocation5 + $0x10] sm:$0xf]
    %v59 = vld [vmem:[#allocation5 + $0x14] sm:$0xf]
    %v60 = vld [vmem:[#allocation5 + $0x18] sm:$0xf]
    %v61 = vld [vmem:[#allocation5 + $0x1c] sm:$0xf]
    %v64 = vunpack.c.l.b16 %v52
    %v65 = vunpack.c.l.b16 %v53
    %v66 = vpack.c.b16 %v65, %v64
    %v75 = vunpack.c.l.b16 %v54
    %v76 = vunpack.c.l.b16 %v55
    %v77 = vunpack.c.l.b16 %v56
    %v78 = vunpack.c.l.b16 %v57
    %v79 = vunpack.c.l.b16 %v58
    %v80 = vunpack.c.l.b16 %v59
    %v81 = vunpack.c.l.b16 %v60
    %v82 = vunpack.c.l.b16 %v61
    %v83 = vpack.c.b16 %v76, %v75
    %v84 = vpack.c.b16 %v78, %v77
    %v85 = vpack.c.b16 %v80, %v79
    %v86 = vpack.c.b16 %v82, %v81
    %vm91 = vcmask 523264
    %v93 = vsel %vm91, %v66, 0
    %95 = vmatprep.subr.bf16.mxu0 0
    %96 = vmatpush1.bf16.msra.mxu0 %v83
    %97 = vmatprep.subr.bf16.mxu0 0
    %98 = vmatpush1.bf16.msra.mxu0 %v84
    %99 = vmatprep.subr.bf16.mxu0 0
    %100 = vmatpush1.bf16.msra.mxu0 %v85
    %101 = vmatprep.subr.bf16.mxu0 0
    %102 = vmatpush1.bf16.msra.mxu0 %v86
    %103 = vmatprep.subr.bf16.mxu0 0
    %104 = vmatpush1.bf16.msra.mxu0 0
    %105 = vmatprep.subr.bf16.mxu0 0
    %106 = vmatpush1.bf16.msra.mxu0 0
    %107 = vmatprep.subr.bf16.mxu0 0
    %108 = vmatpush1.bf16.msra.mxu0 0
    %109 = vmatprep.subr.bf16.mxu0 0
    %110 = vmatpush1.bf16.msra.mxu0 0
    %111 = vmatprep.subr.bf16.mxu0 0
    %112 = vmatpush1.bf16.msra.mxu0 0
    %113 = vmatprep.subr.bf16.mxu0 0
    %114 = vmatpush1.bf16.msra.mxu0 0
    %115 = vmatprep.subr.bf16.mxu0 0
    %116 = vmatpush1.bf16.msra.mxu0 0
    %117 = vmatprep.subr.bf16.mxu0 0
    %118 = vmatpush1.bf16.msra.mxu0 0
    %119 = vmatprep.subr.bf16.mxu0 0
    %120 = vmatpush1.bf16.msra.mxu0 0
    %121 = vmatprep.subr.bf16.mxu0 0
    %122 = vmatpush1.bf16.msra.mxu0 0
    %123 = vmatprep.subr.bf16.mxu0 0
    %124 = vmatpush1.bf16.msra.mxu0 0
    %125 = vmatprep.subr.bf16.mxu0 0
    %126 = vmatpush1.bf16.msra.mxu0 0
    %127 = vmatprep.mubr.bf16.mxu0 0
    %128 = vmatmul.mubr.bf16.gmra.mrb[0].mxu0 %v93
    %v129 = vpop.f32.mrb[0].mxu0
    %v130 = vadd.f32 0.0, %v129
    %v131 = vpop.f32.mrb[0].mxu0
    %v132 = vpop.f32.mrb[0].mxu0
    %v133 = vadd.f32 0.0, %v132
    %v134 = vpop.f32.mrb[0].mxu0
    %135 = vdwg.mxu0
    %v136 = vadd.f32 %v50, %v130
    %v137 = vadd.f32 %v51, %v133
    %138 = vst [vmem:[#allocation7] sm:$0xff] %v136
    %139 = vst [vmem:[#allocation7 + $0x8] sm:$0xff] %v137
    // Predicated region
    $region26: #{tpu_custom_call.1} parent=1 // pred_check
      %p140 = pneg %p44
    $region27: #{tpu_custom_call.1} parent=1 // pred_check_branch
      %142 = sbr.rel (%p140) target = $region29
    $region28: #{tpu_custom_call.1} parent=1 // pred_region
      %v143 = vld [vmem:[#allocation7] sm:$0xff]
      %v144 = vld [vmem:[#allocation7 + $0x8] sm:$0xff]
      %v145 = vld [vmem:[%s2] sm:$0x1]
      %v147 = vlaneseq
      %v148 = vshrl.u32 %v147, 7
      %v149 = vsub.s32 0, %v148
      %v150 = vrot.slane %v145, %v149
      %v152 = vadd.f32 %v143, %v150
      %v153 = vadd.f32 %v144, %v150
      %v154 = vmax.f32 %v152, 0.0
      %v155 = vmax.f32 %v153, 0.0
      %156 = vst [vmem:[#allocation7] sm:$0xff] %v154
      %157 = vst [vmem:[#allocation7 + $0x8] sm:$0xff] %v155
    $region29: #{tpu_custom_call.1} parent=1 // pred_fallthru
      _
    // Predicated region
    $region30: #{tpu_custom_call.1} parent=1 // pred_check
      _
    $region31: #{tpu_custom_call.1} parent=1 // pred_check_branch
      %159 = sbr.rel (0) target = $region33
    $region32: #{tpu_custom_call.1} parent=1 // pred_region
      %s161 = ssub.s32 256, 256
      %162 = vsyncadd [#allocation4], %s161
      %s163 = sshll.u32 [#allocation7], 4
      %s164 = int_to_ptr.vmem [resolvable:$true] %s163
      %169 = dma.vmem_to_hbm [thread:$0]  %s164, 256, %s3, [#allocation4], 128, 128, 8
    $region33: #{tpu_custom_call.1} parent=1 // pred_fallthru
      _
    // Predicated region
    $region34: #{tpu_custom_call.1} parent=1 // pred_check
      _
    $region35: #{tpu_custom_call.1} parent=1 // pred_check_branch
      %171 = sbr.rel (0) target = $region37
    $region36: #{tpu_custom_call.1} parent=1 // pred_region
      %172 = dma.done [#allocation4], 256
    $region37: #{tpu_custom_call.1} parent=1 // pred_fallthru
      _
    %173 = vsyncpa [#allocation3], 1
    %174 = vsyncpa [#allocation6], 1
    %175 = vsyncpa [#allocation4], 1

</llo_original>
